<compile_context>
chip_gen: v6e
topology: v6e:2x2x1
jax: 0.10.0
libtpu: 0.0.40
codegen_flags: <defaults>
</compile_context>

<pallas_src>
import jax
import jax.numpy as jnp
from jax.experimental import pallas as pl
from jax.experimental.pallas import tpu as pltpu


def linear_kernel(x_ref, wt_ref, b_ref, o_ref):
    # x_ref : (tm, K)   tile of input rows
    # wt_ref: (K, N)    weight, already (in_features, out_features) layout
    # b_ref : (1, N)    bias row
    # o_ref : (tm, N)   output tile
    acc = jnp.dot(x_ref[...], wt_ref[...], preferred_element_type=jnp.float32)
    o_ref[...] = (acc + b_ref[...]).astype(o_ref.dtype)


def linear_pallas(x, weight, bias, *, tm=128):
    """x: (B, S, H_in), weight: (H_out, H_in) [PyTorch layout], bias: (H_out,)."""
    B, S, H_in = x.shape
    H_out = weight.shape[0]
    M = B * S

    x2d = x.reshape(M, H_in)
    w_t = weight.T                      # one-time (H_in, H_out) layout; no in-kernel transpose
    b2d = bias.reshape(1, H_out)

    # Row tile: a multiple of 128 when M allows it (MXU-friendly on v5e, and a
    # parallel grid shards rows across the two v7x TensorCores).  Otherwise use
    # a single full-dims block — legal for any M, no wrapper-side padding.
    if M % 128 == 0:
        tm = min(tm, M)
    else:
        tm = M
    grid = (pl.cdiv(M, tm),)

    itemsize = jnp.dtype(x.dtype).itemsize
    cost = pl.CostEstimate(
        flops=2 * M * H_in * H_out,
        transcendentals=0,
        bytes_accessed=(M * H_in + H_in * H_out + H_out + M * H_out) * itemsize,
    )

    out2d = pl.pallas_call(
        linear_kernel,
        out_shape=jax.ShapeDtypeStruct((M, H_out), x.dtype),
        grid=grid,
        in_specs=[
            pl.BlockSpec((tm, H_in), lambda i: (i, 0)),     # x rows tiled
            pl.BlockSpec((H_in, H_out), lambda i: (0, 0)),  # weight resident
            pl.BlockSpec((1, H_out), lambda i: (0, 0)),     # bias resident
        ],
        out_specs=pl.BlockSpec((tm, H_out), lambda i: (i, 0)),
        compiler_params=pltpu.CompilerParams(
            dimension_semantics=("parallel",)),
        cost_estimate=cost,
    )(x2d, w_t, b2d)

    return out2d.reshape(B, S, H_out)


if __name__ == "__main__":
    key = jax.random.PRNGKey(0)
    kx, kw, kb = jax.random.split(key, 3)

    B, S, H = 1, 384, 256
    x = jax.random.normal(kx, (B, S, H), dtype=jnp.float32)
    # PyTorch Linear init: uniform(-1/sqrt(fan_in), 1/sqrt(fan_in))
    bound = 1.0 / jnp.sqrt(jnp.float32(H))
    weight = jax.random.uniform(kw, (H, H), dtype=jnp.float32, minval=-bound, maxval=bound)
    bias = jax.random.uniform(kb, (H,), dtype=jnp.float32, minval=-bound, maxval=bound)

    out = linear_pallas(x, weight, bias)
    jax.block_until_ready(out)

    # Sanity-check against plain JAX reference (x @ W^T + b, PyTorch semantics)
    ref = x @ weight.T + bias
    assert out.shape == (B, S, H)
    assert jnp.allclose(out, ref, atol=1e-4, rtol=1e-4)
    print("KERNEL_OK")
</pallas_src>

<mosaic_0001>
module attributes {stable_mosaic.version = 11 : i64} {
  func.func @linear_kernel(%arg0: i32, %arg1: memref<128x256xf32, #tpu.memory_space<vmem>>, %arg2: memref<256x256xf32, #tpu.memory_space<vmem>>, %arg3: memref<1x256xf32, #tpu.memory_space<vmem>>, %arg4: memref<128x256xf32, #tpu.memory_space<vmem>>) attributes {dimension_semantics = [#tpu.dimension_semantics<parallel>], iteration_bounds = array<i64: 3>, scalar_prefetch = 0 : i64, scratch_operands = 0 : i64, tpu.core_type = #tpu.core_type<tc>, window_params = [{transform_indices = @transform_0, window_bounds = array<i64: 128, 256>}, {pipeline_mode = #tpu.pipeline_mode<synchronous>, transform_indices = @transform_1, window_bounds = array<i64: 256, 256>}, {pipeline_mode = #tpu.pipeline_mode<synchronous>, transform_indices = @transform_2, window_bounds = array<i64: 1, 256>}, {transform_indices = @transform_3, window_bounds = array<i64: 128, 256>}]} {
    %c0 = arith.constant 0 : index
    %c0_0 = arith.constant 0 : index
    %0 = vector.load %arg1[%c0, %c0_0] : memref<128x256xf32, #tpu.memory_space<vmem>>, vector<128x256xf32>
    %c0_1 = arith.constant 0 : index
    %c0_2 = arith.constant 0 : index
    %1 = vector.load %arg2[%c0_1, %c0_2] : memref<256x256xf32, #tpu.memory_space<vmem>>, vector<256x256xf32>
    %cst = arith.constant dense<0.000000e+00> : vector<128x256xf32>
    %2 = tpu.matmul %0, %1, %cst {dimension_numbers = #tpu.dot_dimension_numbers<[1], [0], [0], [1], [0, 0, 1, 1], [], []>} : vector<128x256xf32>, vector<256x256xf32>, vector<128x256xf32> -> vector<128x256xf32>
    %c0_3 = arith.constant 0 : index
    %c0_4 = arith.constant 0 : index
    %3 = vector.load %arg3[%c0_3, %c0_4] : memref<1x256xf32, #tpu.memory_space<vmem>>, vector<1x256xf32>
    %4 = vector.broadcast %3 : vector<1x256xf32> to vector<128x256xf32>
    %5 = arith.addf %2, %4 : vector<128x256xf32>
    %c0_5 = arith.constant 0 : index
    %c0_6 = arith.constant 0 : index
    %6 = vector.load %arg4[%c0_5, %c0_6] : memref<128x256xf32, #tpu.memory_space<vmem>>, vector<128x256xf32>
    tpu.vector_store %arg4[%c0_5, %c0_6], %5 {strides = array<i32>} : memref<128x256xf32, #tpu.memory_space<vmem>>, vector<128x256xf32>,
    return
  }
  func.func @transform_0(%arg0: i32) -> (i32, i32) {
    %c0_i32 = arith.constant 0 : i32
    %c0_i32_0 = arith.constant 0 : i32
    return %arg0, %c0_i32 : i32, i32
  }
  func.func @transform_1(%arg0: i32) -> (i32, i32) {
    %c0_i32 = arith.constant 0 : i32
    %c0_i32_0 = arith.constant 0 : i32
    %c0_i32_1 = arith.constant 0 : i32
    return %c0_i32, %c0_i32_0 : i32, i32
  }
  func.func @transform_2(%arg0: i32) -> (i32, i32) {
    %c0_i32 = arith.constant 0 : i32
    %c0_i32_0 = arith.constant 0 : i32
    %c0_i32_1 = arith.constant 0 : i32
    return %c0_i32, %c0_i32_0 : i32, i32
  }
  func.func @transform_3(%arg0: i32) -> (i32, i32) {
    %c0_i32 = arith.constant 0 : i32
    %c0_i32_0 = arith.constant 0 : i32
    return %arg0, %c0_i32 : i32, i32
  }
}

</mosaic_0001>

<llo_original>
// kernel: tpu_custom_call.1
$region0: #{tpu_custom_call.1}
  #allocation0 [shape = 'u32[]', space=smem, size = 0x4, offset = 0x4, fixed_abs, tag = 'smem constant byte address 0x4 - core index']
  #allocation1 [shape = 'u32[144,128]{1,0:T(1,128)}', space=vmem, size = 0x12000, scoped, tag = 'internal scratch']
  %s0 = inlined_call_operand.hbm [shape: f32[384,256], index: 0, kind: input, shape index: {}]
  %s1 = inlined_call_operand.hbm [shape: f32[256,256], index: 1, kind: input, shape index: {}]
  %s2 = inlined_call_operand.vmem [shape: f32[1,256], index: 2, kind: input, shape index: {}]
  %s3 = inlined_call_operand.hbm [shape: f32[384,256], index: 3, kind: output, shape index: {}]
  %s4 = sld [smem:[#allocation0]]
  $region53: #{tpu_custom_call.1} parent=0
    _
  %s6 = ssub.s32 1, %s4
  %s7 = scalar_select 0, %s6, %s4
  $region1: #{tpu_custom_call.1} parent=0
    #allocation2 [shape = 'u8[262144]{0}', space=vmem, size = 0x40000, scoped, tag = 'input window, operand 0']
    #allocation3 [shape = 's32[2]{0}', space=sflag, size = 0x8, scoped, tag = 'scoped memory for tpu_custom_call.1']
    #allocation4 [shape = 's32[2]{0}', space=sflag, size = 0x8, scoped, tag = 'scoped memory for tpu_custom_call.1']
    #allocation5 [shape = 'u8[262144]{0}', space=vmem, size = 0x40000, scoped, tag = 'input window, operand 1, single buffered']
    #allocation6 [shape = 's32[1]{0}', space=sflag, size = 0x4, scoped, tag = 'scoped memory for tpu_custom_call.1']
    #allocation7 [shape = 'u8[262144]{0}', space=vmem, size = 0x40000, scoped, tag = 'output window, operand 0']
    %8 = vsyncpa [#allocation3], 0
    %s9 = scalar_lea.sflag [#allocation3], 1
    %10 = vsyncpa %s9, 0
    %11 = vsyncpa [#allocation6], 0
    %12 = vsyncpa [#allocation4], 0
    %s13 = scalar_lea.sflag [#allocation4], 1
    %14 = vsyncpa %s13, 0
    loop: start=0, step=1, limit=5
    $region2: #{tpu_custom_call.1} parent=1 // loop_pre_header
      _
    $region3: #{tpu_custom_call.1} parent=1 // loop_header
      %s16 = sphi 0, %s20
      %p17 = scmp.ge.s32.totalorder %s16, 5
      %s26 = sphi 0, %s28
      %s29 = sphi 0, %s26
      %s30 = sphi 0, %s29
      %s46 = sphi 0, %s30
      %s50 = sphi 0, %s50
      %s52 = sphi 0, %s50
      %s53 = sphi 0, %s52
      %s67 = sphi 0, %s53
      %s71 = sphi 0, %s71
      %s73 = sphi 0, %s71
      %s74 = sphi 0, %s73
      %s88 = sphi 0, %s74
      %s94 = sphi 0, %s96
      %s97 = sphi 0, %s94
      %s98 = sphi 0, %s97
      %s114 = sphi 0, %s98
    $region4: #{tpu_custom_call.1} parent=1 // loop_header_branch
      %19 = sbr.rel (%p17) target = $region8
    $region5: #{tpu_custom_call.1} parent=1 // loop_body
      %s21 = ssub.s32 %s16, 1
      %s22 = ssub.s32 %s16, 2
      %s23 = sadd.s32 %s16, 1
      %s24 = ssub.s32 %s16, %s23
      %p25 = scmp.eq.s32.totalorder %s24, 0
      %s27 = sadd.s32 %s26, 1
      %s28 = scalar_select %p25, %s26, %s27
      %p31 = pneg %p25
      %p32 = scmp.eq.s32.totalorder %s16, 2
      %p33 = por %p31, %p32
      %p34 = scmp.ne.s32.totalorder %s26, %s29
      %p35 = scmp.eq.s32.totalorder %s16, 0
      %p36 = por %p34, %p35
      %p37 = scmp.ne.s32.totalorder %s26, %s29
      %p38 = scmp.eq.s32.totalorder %s21, 2
      %p39 = por %p37, %p38
      %p40 = scmp.ne.s32.totalorder %s29, %s30
      %p41 = scmp.eq.s32.totalorder %s21, 0
      %p42 = por %p40, %p41
      %p43 = scmp.ne.s32.totalorder %s29, %s30
      %p44 = scmp.eq.s32.totalorder %s22, 2
      %p45 = por %p43, %p44
      %p47 = scmp.ne.s32.totalorder %s30, %s46
      %p48 = scmp.eq.s32.totalorder %s22, 0
      %p49 = por %p47, %p48
      %s51 = sadd.s32 %s50, 1
      %p54 = scmp.eq.s32.totalorder %s16, 2
      %p55 = scmp.ne.s32.totalorder %s50, %s52
      %p56 = scmp.eq.s32.totalorder %s16, 0
      %p57 = por %p55, %p56
      %p58 = scmp.ne.s32.totalorder %s50, %s52
      %p59 = scmp.eq.s32.totalorder %s21, 2
      %p60 = por %p58, %p59
      %p61 = scmp.ne.s32.totalorder %s52, %s53
      %p62 = scmp.eq.s32.totalorder %s21, 0
      %p63 = por %p61, %p62
      %p64 = scmp.ne.s32.totalorder %s52, %s53
      %p65 = scmp.eq.s32.totalorder %s22, 2
      %p66 = por %p64, %p65
      %p68 = scmp.ne.s32.totalorder %s53, %s67
      %p69 = scmp.eq.s32.totalorder %s22, 0
      %p70 = por %p68, %p69
      %s72 = sadd.s32 %s71, 1
      %p75 = scmp.eq.s32.totalorder %s16, 2
      %p76 = scmp.ne.s32.totalorder %s71, %s73
      %p77 = scmp.eq.s32.totalorder %s16, 0
      %p78 = por %p76, %p77
      %p79 = scmp.ne.s32.totalorder %s71, %s73
      %p80 = scmp.eq.s32.totalorder %s21, 2
      %p81 = por %p79, %p80
      %p82 = scmp.ne.s32.totalorder %s73, %s74
      %p83 = scmp.eq.s32.totalorder %s21, 0
      %p84 = por %p82, %p83
      %p85 = scmp.ne.s32.totalorder %s73, %s74
      %p86 = scmp.eq.s32.totalorder %s22, 2
      %p87 = por %p85, %p86
      %p89 = scmp.ne.s32.totalorder %s74, %s88
      %p90 = scmp.eq.s32.totalorder %s22, 0
      %p91 = por %p89, %p90
      %s92 = ssub.s32 %s16, %s23
      %p93 = scmp.eq.s32.totalorder %s92, 0
      %s95 = sadd.s32 %s94, 1
      %s96 = scalar_select %p93, %s94, %s95
      %p99 = pneg %p93
      %p100 = scmp.eq.s32.totalorder %s16, 2
      %p101 = por %p99, %p100
      %p102 = scmp.ne.s32.totalorder %s94, %s97
      %p103 = scmp.eq.s32.totalorder %s16, 0
      %p104 = por %p102, %p103
      %p105 = scmp.ne.s32.totalorder %s94, %s97
      %p106 = scmp.eq.s32.totalorder %s21, 2
      %p107 = por %p105, %p106
      %p108 = scmp.ne.s32.totalorder %s97, %s98
      %p109 = scmp.eq.s32.totalorder %s21, 0
      %p110 = por %p108, %p109
      %p111 = scmp.ne.s32.totalorder %s97, %s98
      %p112 = scmp.eq.s32.totalorder %s22, 2
      %p113 = por %p111, %p112
      %p115 = scmp.ne.s32.totalorder %s98, %s114
      %p116 = scmp.eq.s32.totalorder %s22, 0
      %p117 = por %p115, %p116
      %p118 = scmp.le.s32.totalorder 1, %s16
      %p119 = scmp.lt.s32.totalorder %s16, 4
      %p120 = pnand %p118, %p119
      %p121 = pneg %p120
      // Predicated region
      $region9: #{tpu_custom_call.1} parent=5 // pred_check
        _
      $region10: #{tpu_custom_call.1} parent=5 // pred_check_branch
        %123 = sbr.rel (%p120) target = $region12
      $region11: #{tpu_custom_call.1} parent=5 // pred_region
        %s124 = ssub.s32 %s16, 1
        // Predicated region
        $region13: #{tpu_custom_call.1} parent=11 // pred_check
          %p125 = pneg %p63
        $region14: #{tpu_custom_call.1} parent=11 // pred_check_branch
          %127 = sbr.rel (%p125) target = $region16
        $region15: #{tpu_custom_call.1} parent=11 // pred_region
          %s129 = ssub.s32 8192, 8192
          %130 = vsyncadd [#allocation6], %s129
          %s131 = sshll.u32 [#allocation5], 4
          %s132 = int_to_ptr.vmem [resolvable:$true] %s131
          %137 = dma.hbm_to_vmem [thread:$0]  %s1, 8192, %s132, [#allocation6], 256, 256, 16
        $region16: #{tpu_custom_call.1} parent=11 // pred_fallthru
          _
        // Predicated region
        $region17: #{tpu_custom_call.1} parent=11 // pred_check
          %p138 = pneg %p84
        $region18: #{tpu_custom_call.1} parent=11 // pred_check_branch
          %140 = sbr.rel (%p138) target = $region20
        $region19: #{tpu_custom_call.1} parent=11 // pred_region
          _
        $region20: #{tpu_custom_call.1} parent=11 // pred_fallthru
          _
      $region12: #{tpu_custom_call.1} parent=5 // pred_fallthru
        _
      %p141 = scmp.lt.s32.totalorder %s16, 3
      // Predicated region
      $region21: #{tpu_custom_call.1} parent=5 // pred_check
        %p142 = pneg %p141
      $region22: #{tpu_custom_call.1} parent=5 // pred_check_branch
        %144 = sbr.rel (%p142) target = $region24
      $region23: #{tpu_custom_call.1} parent=5 // pred_region
        // Predicated region
        $region25: #{tpu_custom_call.1} parent=23 // pred_check
          %p145 = pneg %p36
        $region26: #{tpu_custom_call.1} parent=23 // pred_check_branch
          %147 = sbr.rel (%p145) target = $region28
        $region27: #{tpu_custom_call.1} parent=23 // pred_region
          %s148 = sand.u32 %s26, 1
          %s149 = scalar_lea.sflag [#allocation3], %s148
          %s150 = sand.u32 %s26, 1
          %s151 = smul.addr %s150, 256
          %s152 = scalar_lea.vmem [#allocation2], %s151
          %s153 = smul.u32 16, %s16
          %s155 = ssub.s32 4096, 4096
          %156 = vsyncadd %s149, %s155
          %s157 = smul.addr %s153, 2
          %s158 = smul.addr %s157, 128
          %s159 = scalar_lea.hbm %s0, %s158
          %s160 = sshll.u32 %s152, 4
          %s161 = int_to_ptr.vmem [resolvable:$true] %s160
          %166 = dma.hbm_to_vmem [thread:$0]  %s159, 4096, %s161, %s149, 256, 256, 16
        $region28: #{tpu_custom_call.1} parent=23 // pred_fallthru
          _
      $region24: #{tpu_custom_call.1} parent=5 // pred_fallthru
        _
      %p167 = scmp.le.s32.totalorder 1, %s16
      %p168 = scmp.lt.s32.totalorder %s16, 4
      %p169 = pnand %p167, %p168
      %p170 = pneg %p169
      // Predicated region
      $region29: #{tpu_custom_call.1} parent=5 // pred_check
        _
      $region30: #{tpu_custom_call.1} parent=5 // pred_check_branch
        %172 = sbr.rel (%p169) target = $region32
      $region31: #{tpu_custom_call.1} parent=5 // pred_region
        %s173 = ssub.s32 %s16, 1
        %s174 = sand.u32 %s29, 1
        %s175 = scalar_lea.sflag [#allocation3], %s174
        %s176 = sand.u32 %s29, 1
        %s177 = smul.addr %s176, 256
        %s178 = scalar_lea.vmem [#allocation2], %s177
        // Predicated region
        $region33: #{tpu_custom_call.1} parent=31 // pred_check
          %p179 = pneg %p42
        $region34: #{tpu_custom_call.1} parent=31 // pred_check_branch
          %181 = sbr.rel (%p179) target = $region36
        $region35: #{tpu_custom_call.1} parent=31 // pred_region
          %182 = dma.done %s175, 4096
        $region36: #{tpu_custom_call.1} parent=31 // pred_fallthru
          _
        // Predicated region
        $region37: #{tpu_custom_call.1} parent=31 // pred_check
          %p183 = pneg %p63
        $region38: #{tpu_custom_call.1} parent=31 // pred_check_branch
          %185 = sbr.rel (%p183) target = $region40
        $region39: #{tpu_custom_call.1} parent=31 // pred_region
          %186 = dma.done [#allocation6], 8192
        $region40: #{tpu_custom_call.1} parent=31 // pred_fallthru
          _
        %s187 = sand.u32 %s29, 1
        %s188 = scalar_lea.sflag [#allocation3], %s187
        %s189 = sand.u32 %s29, 1
        %s190 = smul.addr %s189, 256
        %s191 = scalar_lea.vmem [#allocation2], %s190
        %p192 = pneg %p42
        %p193 = pneg %p39
        %p194 = pneg %p63
        %p195 = pneg %p60
        %p196 = pneg %p84
        %p197 = pneg %p81
        %p198 = pneg %p110
        %p199 = pneg %p107
        %s200 = sand.u32 %s97, 1
        %s201 = scalar_lea.sflag [#allocation4], %s200
        %s202 = sand.u32 %s97, 1
        %s203 = smul.addr %s202, 256
        %s204 = scalar_lea.vmem [#allocation7], %s203
        %s205 = smul.u32 16, %s21
        %s206 = smul.u32 16, %s21
        %v207 = vld [vmem:[%s178] sm:$0xff]
        %v208 = vld [vmem:[%s178 + $0x8] sm:$0xff]
        %v209 = vld [vmem:[%s178 + $0x10] sm:$0xff]
        %v210 = vld [vmem:[%s178 + $0x18] sm:$0xff]
        %v211 = vld [vmem:[%s178 + $0x20] sm:$0xff]
        %v212 = vld [vmem:[%s178 + $0x28] sm:$0xff]
        %v213 = vld [vmem:[%s178 + $0x30] sm:$0xff]
        %v214 = vld [vmem:[%s178 + $0x38] sm:$0xff]
        %v215 = vld [vmem:[%s178 + $0x40] sm:$0xff]
        %v216 = vld [vmem:[%s178 + $0x48] sm:$0xff]
        %v217 = vld [vmem:[%s178 + $0x50] sm:$0xff]
        %v218 = vld [vmem:[%s178 + $0x58] sm:$0xff]
        %v219 = vld [vmem:[%s178 + $0x60] sm:$0xff]
        %v220 = vld [vmem:[%s178 + $0x68] sm:$0xff]
        %v221 = vld [vmem:[%s178 + $0x70] sm:$0xff]
        %v222 = vld [vmem:[%s178 + $0x78] sm:$0xff]
        %v223 = vld [vmem:[%s178 + $0x80] sm:$0xff]
        %v224 = vld [vmem:[%s178 + $0x88] sm:$0xff]
        %v225 = vld [vmem:[%s178 + $0x90] sm:$0xff]
        %v226 = vld [vmem:[%s178 + $0x98] sm:$0xff]
        %v227 = vld [vmem:[%s178 + $0xa0] sm:$0xff]
        %v228 = vld [vmem:[%s178 + $0xa8] sm:$0xff]
        %v229 = vld [vmem:[%s178 + $0xb0] sm:$0xff]
        %v230 = vld [vmem:[%s178 + $0xb8] sm:$0xff]
        %v231 = vld [vmem:[%s178 + $0xc0] sm:$0xff]
        %v232 = vld [vmem:[%s178 + $0xc8] sm:$0xff]
        %v233 = vld [vmem:[%s178 + $0xd0] sm:$0xff]
        %v234 = vld [vmem:[%s178 + $0xd8] sm:$0xff]
        %v235 = vld [vmem:[%s178 + $0xe0] sm:$0xff]
        %v236 = vld [vmem:[%s178 + $0xe8] sm:$0xff]
        %v237 = vld [vmem:[%s178 + $0xf0] sm:$0xff]
        %v238 = vld [vmem:[%s178 + $0xf8] sm:$0xff]
        %v239 = vld [vmem:[#allocation5] sm:$0xff]
        %v240 = vld [vmem:[#allocation5 + $0x8] sm:$0xff]
        %v241 = vld [vmem:[#allocation5 + $0x10] sm:$0xff]
        %v242 = vld [vmem:[#allocation5 + $0x18] sm:$0xff]
        %v243 = vld [vmem:[#allocation5 + $0x20] sm:$0xff]
        %v244 = vld [vmem:[#allocation5 + $0x28] sm:$0xff]
        %v245 = vld [vmem:[#allocation5 + $0x30] sm:$0xff]
        %v246 = vld [vmem:[#allocation5 + $0x38] sm:$0xff]
        %v247 = vld [vmem:[#allocation5 + $0x40] sm:$0xff]
        %v248 = vld [vmem:[#allocation5 + $0x48] sm:$0xff]
        %v249 = vld [vmem:[#allocation5 + $0x50] sm:$0xff]
        %v250 = vld [vmem:[#allocation5 + $0x58] sm:$0xff]
        %v251 = vld [vmem:[#allocation5 + $0x60] sm:$0xff]
        %v252 = vld [vmem:[#allocation5 + $0x68] sm:$0xff]
        %v253 = vld [vmem:[#allocation5 + $0x70] sm:$0xff]
        %v254 = vld [vmem:[#allocation5 + $0x78] sm:$0xff]
        %v255 = vld [vmem:[#allocation5 + $0x80] sm:$0xff]
        %v256 = vld [vmem:[#allocation5 + $0x88] sm:$0xff]
        %v257 = vld [vmem:[#allocation5 + $0x90] sm:$0xff]
        %v258 = vld [vmem:[#allocation5 + $0x98] sm:$0xff]
        %v259 = vld [vmem:[#allocation5 + $0xa0] sm:$0xff]
        %v260 = vld [vmem:[#allocation5 + $0xa8] sm:$0xff]
        %v261 = vld [vmem:[#allocation5 + $0xb0] sm:$0xff]
        %v262 = vld [vmem:[#allocation5 + $0xb8] sm:$0xff]
        %v263 = vld [vmem:[#allocation5 + $0xc0] sm:$0xff]
        %v264 = vld [vmem:[#allocation5 + $0xc8] sm:$0xff]
        %v265 = vld [vmem:[#allocation5 + $0xd0] sm:$0xff]
        %v266 = vld [vmem:[#allocation5 + $0xd8] sm:$0xff]
        %v267 = vld [vmem:[#allocation5 + $0xe0] sm:$0xff]
        %v268 = vld [vmem:[#allocation5 + $0xe8] sm:$0xff]
        %v269 = vld [vmem:[#allocation5 + $0xf0] sm:$0xff]
        %v270 = vld [vmem:[#allocation5 + $0xf8] sm:$0xff]
        %v271 = vld [vmem:[#allocation5 + $0x100] sm:$0xff]
        %v272 = vld [vmem:[#allocation5 + $0x108] sm:$0xff]
        %v273 = vld [vmem:[#allocation5 + $0x110] sm:$0xff]
        %v274 = vld [vmem:[#allocation5 + $0x118] sm:$0xff]
        %v275 = vld [vmem:[#allocation5 + $0x120] sm:$0xff]
        %v276 = vld [vmem:[#allocation5 + $0x128] sm:$0xff]
        %v277 = vld [vmem:[#allocation5 + $0x130] sm:$0xff]
        %v278 = vld [vmem:[#allocation5 + $0x138] sm:$0xff]
        %v279 = vld [vmem:[#allocation5 + $0x140] sm:$0xff]
        %v280 = vld [vmem:[#allocation5 + $0x148] sm:$0xff]
        %v281 = vld [vmem:[#allocation5 + $0x150] sm:$0xff]
        %v282 = vld [vmem:[#allocation5 + $0x158] sm:$0xff]
        %v283 = vld [vmem:[#allocation5 + $0x160] sm:$0xff]
        %v284 = vld [vmem:[#allocation5 + $0x168] sm:$0xff]
        %v285 = vld [vmem:[#allocation5 + $0x170] sm:$0xff]
        %v286 = vld [vmem:[#allocation5 + $0x178] sm:$0xff]
        %v287 = vld [vmem:[#allocation5 + $0x180] sm:$0xff]
        %v288 = vld [vmem:[#allocation5 + $0x188] sm:$0xff]
        %v289 = vld [vmem:[#allocation5 + $0x190] sm:$0xff]
        %v290 = vld [vmem:[#allocation5 + $0x198] sm:$0xff]
        %v291 = vld [vmem:[#allocation5 + $0x1a0] sm:$0xff]
        %v292 = vld [vmem:[#allocation5 + $0x1a8] sm:$0xff]
        %v293 = vld [vmem:[#allocation5 + $0x1b0] sm:$0xff]
        %v294 = vld [vmem:[#allocation5 + $0x1b8] sm:$0xff]
        %v295 = vld [vmem:[#allocation5 + $0x1c0] sm:$0xff]
        %v296 = vld [vmem:[#allocation5 + $0x1c8] sm:$0xff]
        %v297 = vld [vmem:[#allocation5 + $0x1d0] sm:$0xff]
        %v298 = vld [vmem:[#allocation5 + $0x1d8] sm:$0xff]
        %v299 = vld [vmem:[#allocation5 + $0x1e0] sm:$0xff]
        %v300 = vld [vmem:[#allocation5 + $0x1e8] sm:$0xff]
        %v301 = vld [vmem:[#allocation5 + $0x1f0] sm:$0xff]
        %v302 = vld [vmem:[#allocation5 + $0x1f8] sm:$0xff]
        %v303 = vld [vmem:[%s2] sm:$0x3]
        %v305 = vlaneseq
        %v306 = vshrl.u32 %v305, 7
        %v307 = vsub.s32 0, %v306
        %v308 = vrot.slane %v303, %v307
        %v309 = vlaneseq
        %v310 = vshrl.u32 %v309, 7
        %v311 = vsub.s32 1, %v310
        %v312 = vrot.slane %v303, %v311
        %315 = vmatprep.subr.mxu0 %v270
        %316 = vmatpush1.msra.mxu0 %v269
        %317 = vmatprep.subr.mxu0 %v268
        %318 = vmatpush1.msra.mxu0 %v267
        %319 = vmatprep.subr.mxu0 %v266
        %320 = vmatpush1.msra.mxu0 %v265
        %321 = vmatprep.subr.mxu0 %v264
        %322 = vmatpush1.msra.mxu0 %v263
        %323 = vmatprep.subr.mxu0 %v262
        %324 = vmatpush1.msra.mxu0 %v261
        %325 = vmatprep.subr.mxu0 %v260
        %326 = vmatpush1.msra.mxu0 %v259
        %327 = vmatprep.subr.mxu0 %v258
        %328 = vmatpush1.msra.mxu0 %v257
        %329 = vmatprep.subr.mxu0 %v256
        %330 = vmatpush1.msra.mxu0 %v255
        %331 = vmatprep.subr.mxu0 %v254
        %332 = vmatpush1.msra.mxu0 %v253
        %333 = vmatprep.subr.mxu0 %v252
        %334 = vmatpush1.msra.mxu0 %v251
        %335 = vmatprep.subr.mxu0 %v250
        %336 = vmatpush1.msra.mxu0 %v249
        %337 = vmatprep.subr.mxu0 %v248
        %338 = vmatpush1.msra.mxu0 %v247
        %339 = vmatprep.subr.mxu0 %v246
        %340 = vmatpush1.msra.mxu0 %v245
        %341 = vmatprep.subr.mxu0 %v244
        %342 = vmatpush1.msra.mxu0 %v243
        %343 = vmatprep.subr.mxu0 %v242
        %344 = vmatpush1.msra.mxu0 %v241
        %345 = vmatprep.subr.mxu0 %v240
        %346 = vmatpush1.msra.mxu0 %v239
        %347 = vmatprep.subr.mxu0 %v302
        %348 = vmatpush2.msra.mxu0 %v301
        %349 = vmatprep.subr.mxu0 %v300
        %350 = vmatpush2.msra.mxu0 %v299
        %351 = vmatprep.subr.mxu0 %v298
        %352 = vmatpush2.msra.mxu0 %v297
        %353 = vmatprep.subr.mxu0 %v296
        %354 = vmatpush2.msra.mxu0 %v295
        %355 = vmatprep.subr.mxu0 %v294
        %356 = vmatpush2.msra.mxu0 %v293
        %357 = vmatprep.subr.mxu0 %v292
        %358 = vmatpush2.msra.mxu0 %v291
        %359 = vmatprep.subr.mxu0 %v290
        %360 = vmatpush2.msra.mxu0 %v289
        %361 = vmatprep.subr.mxu0 %v288
        %362 = vmatpush2.msra.mxu0 %v287
        %363 = vmatprep.subr.mxu0 %v286
        %364 = vmatpush2.msra.mxu0 %v285
        %365 = vmatprep.subr.mxu0 %v284
        %366 = vmatpush2.msra.mxu0 %v283
        %367 = vmatprep.subr.mxu0 %v282
        %368 = vmatpush2.msra.mxu0 %v281
        %369 = vmatprep.subr.mxu0 %v280
        %370 = vmatpush2.msra.mxu0 %v279
        %371 = vmatprep.subr.mxu0 %v278
        %372 = vmatpush2.msra.mxu0 %v277
        %373 = vmatprep.subr.mxu0 %v276
        %374 = vmatpush2.msra.mxu0 %v275
        %375 = vmatprep.subr.mxu0 %v274
        %376 = vmatpush2.msra.mxu0 %v273
        %377 = vmatprep.subr.mxu0 %v272
        %378 = vmatpush2.msra.mxu0 %v271
        %379 = vmatprep.mubr.f32.mxu0 %v208
        %380 = vmatmul.mubr.f32.gmra.mxu0 %v207
        %v381 = vpop.f32.mrf.mxu0
        %v382 = vadd.f32 %v308, %v381
        %v383 = vpop.f32.mrf.mxu0
        %v384 = vadd.f32 %v312, %v383
        %385 = vmatprep.mubr.f32.mxu0 %v210
        %386 = vmatmul.mubr.f32.gmra.mxu0 %v209
        %v387 = vpop.f32.mrf.mxu0
        %v388 = vadd.f32 %v308, %v387
        %v389 = vpop.f32.mrf.mxu0
        %v390 = vadd.f32 %v312, %v389
        %391 = vmatprep.mubr.f32.mxu0 %v212
        %392 = vmatmul.mubr.f32.gmra.mxu0 %v211
        %v393 = vpop.f32.mrf.mxu0
        %v394 = vadd.f32 %v308, %v393
        %v395 = vpop.f32.mrf.mxu0
        %v396 = vadd.f32 %v312, %v395
        %397 = vmatprep.mubr.f32.mxu0 %v214
        %398 = vmatmul.mubr.f32.gmra.mxu0 %v213
        %v399 = vpop.f32.mrf.mxu0
        %v400 = vadd.f32 %v308, %v399
        %v401 = vpop.f32.mrf.mxu0
        %v402 = vadd.f32 %v312, %v401
        %403 = vmatprep.mubr.f32.mxu0 %v216
        %404 = vmatmul.mubr.f32.gmra.mxu0 %v215
        %v405 = vpop.f32.mrf.mxu0
        %v406 = vadd.f32 %v308, %v405
        %v407 = vpop.f32.mrf.mxu0
        %v408 = vadd.f32 %v312, %v407
        %409 = vmatprep.mubr.f32.mxu0 %v218
        %410 = vmatmul.mubr.f32.gmra.mxu0 %v217
        %v411 = vpop.f32.mrf.mxu0
        %v412 = vadd.f32 %v308, %v411
        %v413 = vpop.f32.mrf.mxu0
        %v414 = vadd.f32 %v312, %v413
        %415 = vmatprep.mubr.f32.mxu0 %v220
        %416 = vmatmul.mubr.f32.gmra.mxu0 %v219
        %v417 = vpop.f32.mrf.mxu0
        %v418 = vadd.f32 %v308, %v417
        %v419 = vpop.f32.mrf.mxu0
        %v420 = vadd.f32 %v312, %v419
        %421 = vmatprep.mubr.f32.mxu0 %v222
        %422 = vmatmul.mubr.f32.gmra.mxu0 %v221
        %v423 = vpop.f32.mrf.mxu0
        %v424 = vadd.f32 %v308, %v423
        %v425 = vpop.f32.mrf.mxu0
        %v426 = vadd.f32 %v312, %v425
        %427 = vmatprep.mubr.f32.mxu0 %v224
        %428 = vmatmul.mubr.f32.gmra.mxu0 %v223
        %v429 = vpop.f32.mrf.mxu0
        %v430 = vadd.f32 %v308, %v429
        %v431 = vpop.f32.mrf.mxu0
        %v432 = vadd.f32 %v312, %v431
        %433 = vmatprep.mubr.f32.mxu0 %v226
        %434 = vmatmul.mubr.f32.gmra.mxu0 %v225
        %v435 = vpop.f32.mrf.mxu0
        %v436 = vadd.f32 %v308, %v435
        %v437 = vpop.f32.mrf.mxu0
        %v438 = vadd.f32 %v312, %v437
        %439 = vmatprep.mubr.f32.mxu0 %v228
        %440 = vmatmul.mubr.f32.gmra.mxu0 %v227
        %v441 = vpop.f32.mrf.mxu0
        %v442 = vadd.f32 %v308, %v441
        %v443 = vpop.f32.mrf.mxu0
        %v444 = vadd.f32 %v312, %v443
        %445 = vmatprep.mubr.f32.mxu0 %v230
        %446 = vmatmul.mubr.f32.gmra.mxu0 %v229
        %v447 = vpop.f32.mrf.mxu0
        %v448 = vadd.f32 %v308, %v447
        %v449 = vpop.f32.mrf.mxu0
        %v450 = vadd.f32 %v312, %v449
        %451 = vmatprep.mubr.f32.mxu0 %v232
        %452 = vmatmul.mubr.f32.gmra.mxu0 %v231
        %v453 = vpop.f32.mrf.mxu0
        %v454 = vadd.f32 %v308, %v453
        %v455 = vpop.f32.mrf.mxu0
        %v456 = vadd.f32 %v312, %v455
        %457 = vmatprep.mubr.f32.mxu0 %v234
        %458 = vmatmul.mubr.f32.gmra.mxu0 %v233
        %v459 = vpop.f32.mrf.mxu0
        %v460 = vadd.f32 %v308, %v459
        %v461 = vpop.f32.mrf.mxu0
        %v462 = vadd.f32 %v312, %v461
        %463 = vmatprep.mubr.f32.mxu0 %v236
        %464 = vmatmul.mubr.f32.gmra.mxu0 %v235
        %v465 = vpop.f32.mrf.mxu0
        %v466 = vadd.f32 %v308, %v465
        %v467 = vpop.f32.mrf.mxu0
        %v468 = vadd.f32 %v312, %v467
        %469 = vmatprep.mubr.f32.mxu0 %v238
        %470 = vmatmul.mubr.f32.gmra.mxu0 %v237
        %v471 = vpop.f32.mrf.mxu0
        %v472 = vadd.f32 %v308, %v471
        %v473 = vpop.f32.mrf.mxu0
        %v474 = vadd.f32 %v312, %v473
        %475 = vdwg.mxu0
        %476 = vst [vmem:[%s204] sm:$0xff] %v382
        %477 = vst [vmem:[%s204 + $0x8] sm:$0xff] %v384
        %478 = vst [vmem:[%s204 + $0x10] sm:$0xff] %v388
        %479 = vst [vmem:[%s204 + $0x18] sm:$0xff] %v390
        %480 = vst [vmem:[%s204 + $0x20] sm:$0xff] %v394
        %481 = vst [vmem:[%s204 + $0x28] sm:$0xff] %v396
        %482 = vst [vmem:[%s204 + $0x30] sm:$0xff] %v400
        %483 = vst [vmem:[%s204 + $0x38] sm:$0xff] %v402
        %484 = vst [vmem:[%s204 + $0x40] sm:$0xff] %v406
        %485 = vst [vmem:[%s204 + $0x48] sm:$0xff] %v408
        %486 = vst [vmem:[%s204 + $0x50] sm:$0xff] %v412
        %487 = vst [vmem:[%s204 + $0x58] sm:$0xff] %v414
        %488 = vst [vmem:[%s204 + $0x60] sm:$0xff] %v418
        %489 = vst [vmem:[%s204 + $0x68] sm:$0xff] %v420
        %490 = vst [vmem:[%s204 + $0x70] sm:$0xff] %v424
        %491 = vst [vmem:[%s204 + $0x78] sm:$0xff] %v426
        %492 = vst [vmem:[%s204 + $0x80] sm:$0xff] %v430
        %493 = vst [vmem:[%s204 + $0x88] sm:$0xff] %v432
        %494 = vst [vmem:[%s204 + $0x90] sm:$0xff] %v436
        %495 = vst [vmem:[%s204 + $0x98] sm:$0xff] %v438
        %496 = vst [vmem:[%s204 + $0xa0] sm:$0xff] %v442
        %497 = vst [vmem:[%s204 + $0xa8] sm:$0xff] %v444
        %498 = vst [vmem:[%s204 + $0xb0] sm:$0xff] %v448
        %499 = vst [vmem:[%s204 + $0xb8] sm:$0xff] %v450
        %500 = vst [vmem:[%s204 + $0xc0] sm:$0xff] %v454
        %501 = vst [vmem:[%s204 + $0xc8] sm:$0xff] %v456
        %502 = vst [vmem:[%s204 + $0xd0] sm:$0xff] %v460
        %503 = vst [vmem:[%s204 + $0xd8] sm:$0xff] %v462
        %504 = vst [vmem:[%s204 + $0xe0] sm:$0xff] %v466
        %505 = vst [vmem:[%s204 + $0xe8] sm:$0xff] %v468
        %506 = vst [vmem:[%s204 + $0xf0] sm:$0xff] %v472
        %507 = vst [vmem:[%s204 + $0xf8] sm:$0xff] %v474
        %s508 = sand.u32 %s97, 1
        %s509 = scalar_lea.sflag [#allocation4], %s508
        %s510 = sand.u32 %s97, 1
        %s511 = smul.addr %s510, 256
        %s512 = scalar_lea.vmem [#allocation7], %s511
        // Predicated region
        $region41: #{tpu_custom_call.1} parent=31 // pred_check
          %p513 = pneg %p107
        $region42: #{tpu_custom_call.1} parent=31 // pred_check_branch
          %515 = sbr.rel (%p513) target = $region44
        $region43: #{tpu_custom_call.1} parent=31 // pred_region
          %s516 = smul.u32 16, %s21
          %s518 = ssub.s32 4096, 4096
          %519 = vsyncadd %s509, %s518
          %s520 = smul.addr %s516, 2
          %s521 = smul.addr %s520, 128
          %s522 = scalar_lea.hbm %s3, %s521
          %s523 = sshll.u32 %s512, 4
          %s524 = int_to_ptr.vmem [resolvable:$true] %s523
          %529 = dma.vmem_to_hbm [thread:$0]  %s524, 4096, %s522, %s509, 256, 256, 16
        $region44: #{tpu_custom_call.1} parent=31 // pred_fallthru
          _
      $region32: #{tpu_custom_call.1} parent=5 // pred_fallthru
        _
      %p530 = scmp.le.s32.totalorder 2, %s16
      // Predicated region
      $region45: #{tpu_custom_call.1} parent=5 // pred_check
        %p531 = pneg %p530
      $region46: #{tpu_custom_call.1} parent=5 // pred_check_branch
        %533 = sbr.rel (%p531) target = $region48
      $region47: #{tpu_custom_call.1} parent=5 // pred_region
        %s534 = ssub.s32 %s16, 2
        // Predicated region
        $region49: #{tpu_custom_call.1} parent=47 // pred_check
          %p535 = pneg %p113
        $region50: #{tpu_custom_call.1} parent=47 // pred_check_branch
          %537 = sbr.rel (%p535) target = $region52
        $region51: #{tpu_custom_call.1} parent=47 // pred_region
          %s538 = sand.u32 %s98, 1
          %s539 = scalar_lea.sflag [#allocation4], %s538
          %s540 = sand.u32 %s98, 1
          %s541 = smul.addr %s540, 256
          %s542 = scalar_lea.vmem [#allocation7], %s541
          %543 = dma.done %s539, 4096
        $region52: #{tpu_custom_call.1} parent=47 // pred_fallthru
          _
      $region48: #{tpu_custom_call.1} parent=5 // pred_fallthru
        _
    $region6: #{tpu_custom_call.1} parent=1 // loop_footer
      %s20 = sadd.s32 1, %s16
    $region7: #{tpu_custom_call.1} parent=1 // loop_footer_branch
      %15 = sbr.rel target = $region3
    $region8: #{tpu_custom_call.1} parent=1 // loop_exit
      _
    %544 = vsyncpa [#allocation3], 1
    %s545 = scalar_lea.sflag [#allocation3], 1
    %546 = vsyncpa %s545, 1
    %547 = vsyncpa [#allocation6], 1
    %548 = vsyncpa [#allocation4], 1
    %s549 = scalar_lea.sflag [#allocation4], 1
    %550 = vsyncpa %s549, 1

</llo_original>
